<compile_context>
chip_gen: v7x
topology: tpu7x:2x2x1
jax: 0.10.0
libtpu: 0.0.40
codegen_flags: <defaults>
</compile_context>

<pallas_src>
import jax
import jax.numpy as jnp
from jax.experimental import pallas as pl
from jax.experimental.pallas import tpu as pltpu


def _context_block_kernel(x_ref, wm_ref, w1t_ref, w2_ref, o_ref):
    # x_ref  : (1, C, HW)  per-batch slab
    # wm_ref : (C, 1)      conv_mask weight (column)
    # w1t_ref: (C, C)      first 1x1 conv weight, pre-TRANSPOSED -> [in, out]
    # w2_ref : (C, C)      second 1x1 conv weight               -> [out, in]
    x = x_ref[0].astype(jnp.float32)                       # (C, HW)

    # conv_mask: 1x1 conv C -> 1 at every spatial position
    wm = wm_ref[...]                                       # (C, 1), already f32
    scores = jnp.sum(x * wm, axis=0, keepdims=True)        # (1, HW)

    # softmax over the spatial axis
    m = jnp.max(scores, axis=-1, keepdims=True)
    e = jnp.exp(scores - m)
    denom = jnp.sum(e, axis=-1, keepdims=True)
    attn = e / denom                                       # (1, HW)

    # weighted global pooling: context[c] = sum_hw x[c, hw] * attn[hw]
    context = jnp.sum(x * attn, axis=-1, keepdims=True)    # (C, 1)

    # channel_add_conv: 1x1 conv -> LeakyReLU(0.2) -> 1x1 conv
    h = jnp.sum(w1t_ref[...] * context, axis=0, keepdims=True)   # (1, C)
    h = jnp.where(h >= 0, h, 0.2 * h)                             # LeakyReLU(0.2)
    add = jnp.sum(w2_ref[...] * h, axis=-1, keepdims=True)        # (C, 1)

    # residual add, broadcast over the spatial (lane) axis
    o_ref[0] = (x + add).astype(o_ref.dtype)


def context_block(x, w_mask, w1, w2):
    """ContextBlock.forward (bias=False, the module default).

    x      : (B, C, H, W)
    w_mask : conv_mask weight, (1, C, 1, 1) or (C,)
    w1     : first channel_add_conv weight,  (C, C, 1, 1) or (C, C) as [out, in]
    w2     : second channel_add_conv weight, (C, C, 1, 1) or (C, C) as [out, in]
    """
    # TODO(synk): bias=True construction of the module is not implemented
    # (default is bias=False); adding the three bias vectors is trivial if needed.
    B, C, H, W = x.shape
    HW = H * W
    x3 = x.reshape(B, C, HW)                                  # view, no HBM copy
    wm = w_mask.reshape(C, 1).astype(jnp.float32)
    w1t = w1.reshape(C, C).T.astype(jnp.float32)              # pre-transpose: [in, out]
    w2m = w2.reshape(C, C).astype(jnp.float32)

    itemsize = x.dtype.itemsize
    slab_bytes = C * HW * itemsize
    # TODO(synk): for very large H*W (per-batch slab beyond a few MiB) tile the
    # spatial axis with an online-softmax accumulation pass instead of holding
    # the whole (C, H*W) slab in VMEM.
    vmem_limit = int(min(max(6 * slab_bytes + (2 << 20), 16 << 20), 32 << 20))

    flops = B * (5 * C * HW + 4 * C * C + 5 * HW)
    bytes_accessed = 2 * B * slab_bytes + (C + 2 * C * C) * 4

    out = pl.pallas_call(
        _context_block_kernel,
        out_shape=jax.ShapeDtypeStruct((B, C, HW), x.dtype),
        grid_spec=pltpu.PrefetchScalarGridSpec(
            num_scalar_prefetch=0,
            grid=(B,),
            in_specs=[
                pl.BlockSpec((1, C, HW), lambda b: (b, 0, 0)),
                pl.BlockSpec((C, 1), lambda b: (0, 0)),
                pl.BlockSpec((C, C), lambda b: (0, 0)),
                pl.BlockSpec((C, C), lambda b: (0, 0)),
            ],
            out_specs=pl.BlockSpec((1, C, HW), lambda b: (b, 0, 0)),
        ),
        compiler_params=pltpu.CompilerParams(
            dimension_semantics=("parallel",),   # batch grid splits across v7x's 2 TCs
            vmem_limit_bytes=vmem_limit,
        ),
        cost_estimate=pl.CostEstimate(
            flops=flops,
            transcendentals=B * HW,
            bytes_accessed=bytes_accessed,
        ),
    )(x3, wm, w1t, w2m)
    return out.reshape(B, C, H, W)


def _reference_context_block(x, w_mask, w1, w2):
    B, C, H, W = x.shape
    HW = H * W
    xf = x.astype(jnp.float32).reshape(B, C, HW)
    wm = w_mask.reshape(C).astype(jnp.float32)
    scores = jnp.sum(xf * wm[None, :, None], axis=1)               # (B, HW)
    attn = jax.nn.softmax(scores, axis=-1)                          # (B, HW)
    context = jnp.sum(xf * attn[:, None, :], axis=-1)               # (B, C)
    w1m = w1.reshape(C, C).astype(jnp.float32)
    w2m = w2.reshape(C, C).astype(jnp.float32)
    h = jnp.sum(w1m[None, :, :] * context[:, None, :], axis=-1)     # (B, C)
    h = jnp.where(h >= 0, h, 0.2 * h)                               # LeakyReLU(0.2)
    add = jnp.sum(w2m[None, :, :] * h[:, None, :], axis=-1)         # (B, C)
    out = xf.reshape(B, C, H, W) + add[:, :, None, None]
    return out.astype(x.dtype)


if __name__ == "__main__":
    key = jax.random.PRNGKey(0)
    kx, km, k1, k2 = jax.random.split(key, 4)

    B, C, H, W = 2, 32, 16, 16          # n_feat = 32
    x = jax.random.normal(kx, (B, C, H, W), dtype=jnp.float32)

    scale = 1.0 / jnp.sqrt(jnp.float32(C))
    w_mask = jax.random.normal(km, (1, C, 1, 1), dtype=jnp.float32) * scale
    w1 = jax.random.normal(k1, (C, C, 1, 1), dtype=jnp.float32) * scale
    w2 = jax.random.normal(k2, (C, C, 1, 1), dtype=jnp.float32) * scale

    out = context_block(x, w_mask, w1, w2)
    out = jax.block_until_ready(out)

    ref = _reference_context_block(x, w_mask, w1, w2)
    assert out.shape == x.shape
    assert jnp.allclose(out, ref, atol=1e-4, rtol=1e-4), (
        "mismatch vs reference, max abs err = "
        f"{float(jnp.max(jnp.abs(out - ref)))}"
    )

    print("KERNEL_OK")
</pallas_src>

<mosaic_0001>
module attributes {stable_mosaic.version = 11 : i64} {
  func.func @_context_block_kernel(%arg0: i32, %arg1: memref<1x32x256xf32, #tpu.memory_space<vmem>>, %arg2: memref<32x1xf32, #tpu.memory_space<vmem>>, %arg3: memref<32x32xf32, #tpu.memory_space<vmem>>, %arg4: memref<32x32xf32, #tpu.memory_space<vmem>>, %arg5: memref<1x32x256xf32, #tpu.memory_space<vmem>>) attributes {dimension_semantics = [#tpu.dimension_semantics<parallel>], iteration_bounds = array<i64: 2>, scalar_prefetch = 0 : i64, scratch_operands = 0 : i64, tpu.core_type = #tpu.core_type<tc>, window_params = [{transform_indices = @transform_0, window_bounds = array<i64: 1, 32, 256>}, {pipeline_mode = #tpu.pipeline_mode<synchronous>, transform_indices = @transform_1, window_bounds = array<i64: 32, 1>}, {pipeline_mode = #tpu.pipeline_mode<synchronous>, transform_indices = @transform_2, window_bounds = array<i64: 32, 32>}, {pipeline_mode = #tpu.pipeline_mode<synchronous>, transform_indices = @transform_3, window_bounds = array<i64: 32, 32>}, {transform_indices = @transform_4, window_bounds = array<i64: 1, 32, 256>}]} {
    %c0 = arith.constant 0 : index
    %c0_0 = arith.constant 0 : index
    %c0_1 = arith.constant 0 : index
    %0 = vector.load %arg1[%c0, %c0_0, %c0_1] : memref<1x32x256xf32, #tpu.memory_space<vmem>>, vector<1x32x256xf32>
    %1 = vector.shape_cast %0 : vector<1x32x256xf32> to vector<32x256xf32>
    %c0_2 = arith.constant 0 : index
    %c0_3 = arith.constant 0 : index
    %2 = vector.load %arg2[%c0_2, %c0_3] : memref<32x1xf32, #tpu.memory_space<vmem>>, vector<32x1xf32>
    %3 = vector.broadcast %2 : vector<32x1xf32> to vector<32x256xf32>
    %4 = arith.mulf %1, %3 : vector<32x256xf32>
    %cst = arith.constant dense<0.000000e+00> : vector<256xf32>
    %5 = vector.multi_reduction <add>, %4, %cst [0] : vector<32x256xf32> to vector<256xf32>
    %6 = vector.shape_cast %5 : vector<256xf32> to vector<1x256xf32>
    %cst_4 = arith.constant dense<0xFF800000> : vector<1xf32>
    %7 = vector.multi_reduction <maximumf>, %6, %cst_4 [1] : vector<1x256xf32> to vector<1xf32>
    %8 = vector.shape_cast %7 : vector<1xf32> to vector<1x1xf32>
    %9 = vector.broadcast %8 : vector<1x1xf32> to vector<1x256xf32>
    %10 = arith.subf %6, %9 : vector<1x256xf32>
    %11 = math.exp %10 : vector<1x256xf32>
    %cst_5 = arith.constant dense<0.000000e+00> : vector<1xf32>
    %12 = vector.multi_reduction <add>, %11, %cst_5 [1] : vector<1x256xf32> to vector<1xf32>
    %13 = vector.shape_cast %12 : vector<1xf32> to vector<1x1xf32>
    %14 = vector.broadcast %13 : vector<1x1xf32> to vector<1x256xf32>
    %15 = arith.divf %11, %14 : vector<1x256xf32>
    %16 = vector.broadcast %15 : vector<1x256xf32> to vector<32x256xf32>
    %17 = arith.mulf %1, %16 : vector<32x256xf32>
    %cst_6 = arith.constant dense<0.000000e+00> : vector<32xf32>
    %18 = vector.multi_reduction <add>, %17, %cst_6 [1] : vector<32x256xf32> to vector<32xf32>
    %19 = vector.shape_cast %18 : vector<32xf32> to vector<32x1xf32>
    %c0_7 = arith.constant 0 : index
    %c0_8 = arith.constant 0 : index
    %20 = vector.load %arg3[%c0_7, %c0_8] : memref<32x32xf32, #tpu.memory_space<vmem>>, vector<32x32xf32>
    %21 = vector.broadcast %19 : vector<32x1xf32> to vector<32x32xf32>
    %22 = arith.mulf %20, %21 : vector<32x32xf32>
    %cst_9 = arith.constant dense<0.000000e+00> : vector<32xf32>
    %23 = vector.multi_reduction <add>, %22, %cst_9 [0] : vector<32x32xf32> to vector<32xf32>
    %24 = vector.shape_cast %23 : vector<32xf32> to vector<1x32xf32>
    %cst_10 = arith.constant 0.000000e+00 : f32
    %25 = vector.broadcast %cst_10 : f32 to vector<1x32xf32>
    %26 = arith.cmpf oge, %24, %25 : vector<1x32xf32>
    %cst_11 = arith.constant 2.000000e-01 : f32
    %27 = vector.broadcast %cst_11 : f32 to vector<1x32xf32>
    %28 = arith.mulf %27, %24 : vector<1x32xf32>
    %29 = arith.select %26, %24, %28 : vector<1x32xi1>, vector<1x32xf32>
    %c0_12 = arith.constant 0 : index
    %c0_13 = arith.constant 0 : index
    %30 = vector.load %arg4[%c0_12, %c0_13] : memref<32x32xf32, #tpu.memory_space<vmem>>, vector<32x32xf32>
    %31 = vector.broadcast %29 : vector<1x32xf32> to vector<32x32xf32>
    %32 = arith.mulf %30, %31 : vector<32x32xf32>
    %cst_14 = arith.constant dense<0.000000e+00> : vector<32xf32>
    %33 = vector.multi_reduction <add>, %32, %cst_14 [1] : vector<32x32xf32> to vector<32xf32>
    %34 = vector.shape_cast %33 : vector<32xf32> to vector<32x1xf32>
    %35 = vector.broadcast %34 : vector<32x1xf32> to vector<32x256xf32>
    %36 = arith.addf %1, %35 : vector<32x256xf32>
    %c0_15 = arith.constant 0 : index
    %c0_16 = arith.constant 0 : index
    %c0_17 = arith.constant 0 : index
    %37 = vector.load %arg5[%c0_15, %c0_16, %c0_17] : memref<1x32x256xf32, #tpu.memory_space<vmem>>, vector<1x32x256xf32>
    %38 = vector.shape_cast %37 : vector<1x32x256xf32> to vector<32x256xf32>
    %39 = vector.shape_cast %36 : vector<32x256xf32> to vector<1x32x256xf32>
    tpu.vector_store %arg5[%c0_15, %c0_16, %c0_17], %39 {strides = array<i32>} : memref<1x32x256xf32, #tpu.memory_space<vmem>>, vector<1x32x256xf32>,
    return
  }
  func.func @transform_0(%arg0: i32) -> (i32, i32, i32) {
    %c0_i32 = arith.constant 0 : i32
    %c0_i32_0 = arith.constant 0 : i32
    %c0_i32_1 = arith.constant 0 : i32
    return %arg0, %c0_i32, %c0_i32_0 : i32, i32, i32
  }
  func.func @transform_1(%arg0: i32) -> (i32, i32) {
    %c0_i32 = arith.constant 0 : i32
    %c0_i32_0 = arith.constant 0 : i32
    %c0_i32_1 = arith.constant 0 : i32
    return %c0_i32, %c0_i32_0 : i32, i32
  }
  func.func @transform_2(%arg0: i32) -> (i32, i32) {
    %c0_i32 = arith.constant 0 : i32
    %c0_i32_0 = arith.constant 0 : i32
    %c0_i32_1 = arith.constant 0 : i32
    return %c0_i32, %c0_i32_0 : i32, i32
  }
  func.func @transform_3(%arg0: i32) -> (i32, i32) {
    %c0_i32 = arith.constant 0 : i32
    %c0_i32_0 = arith.constant 0 : i32
    %c0_i32_1 = arith.constant 0 : i32
    return %c0_i32, %c0_i32_0 : i32, i32
  }
  func.func @transform_4(%arg0: i32) -> (i32, i32, i32) {
    %c0_i32 = arith.constant 0 : i32
    %c0_i32_0 = arith.constant 0 : i32
    %c0_i32_1 = arith.constant 0 : i32
    return %arg0, %c0_i32, %c0_i32_0 : i32, i32, i32
  }
}

</mosaic_0001>

<llo_original>
// kernel: tpu_custom_call.1
$region0: #{tpu_custom_call.1}
  #allocation0 [shape = 'u32[]', space=smem, size = 0x4, offset = 0x4, fixed_abs, tag = 'smem constant byte address 0x4 - core index']
  #allocation1 [shape = 'u32[144,128]{1,0:T(1,128)}', space=vmem, size = 0x12000, scoped, tag = 'internal scratch']
  %s0 = inlined_call_operand.hbm [shape: f32[2,32,256], index: 0, kind: input, shape index: {}]
  %s1 = inlined_call_operand.vmem [shape: f32[32,1], index: 1, kind: input, shape index: {}]
  %s2 = inlined_call_operand.vmem [shape: f32[32,32], index: 2, kind: input, shape index: {}]
  %s3 = inlined_call_operand.hbm [shape: f32[32,32], index: 3, kind: input, shape index: {}]
  %s4 = inlined_call_operand.hbm [shape: f32[2,32,256], index: 4, kind: output, shape index: {}]
  %s5 = sld [smem:[#allocation0]]
  $region57: #{tpu_custom_call.1} parent=0
    _
  %s7 = ssub.s32 1, %s5
  %s8 = scalar_select 0, %s7, %s5
  $region1: #{tpu_custom_call.1} parent=0
    #allocation2 [shape = 'u8[65536]{0}', space=vmem, size = 0x10000, scoped, tag = 'input window, operand 0']
    #allocation3 [shape = 's32[2]{0}', space=sflag, size = 0x8, scoped, tag = 'scoped memory for tpu_custom_call.1']
    #allocation4 [shape = 's32[2]{0}', space=sflag, size = 0x8, scoped, tag = 'scoped memory for tpu_custom_call.1']
    #allocation5 [shape = 'u8[16384]{0}', space=vmem, size = 0x4000, scoped, tag = 'input window, operand 3, single buffered']
    #allocation6 [shape = 's32[1]{0}', space=sflag, size = 0x4, scoped, tag = 'scoped memory for tpu_custom_call.1']
    #allocation7 [shape = 'u8[65536]{0}', space=vmem, size = 0x10000, scoped, tag = 'output window, operand 0']
    %9 = vsyncpa [#allocation3], 0
    %s10 = scalar_lea.sflag [#allocation3], 1
    %11 = vsyncpa %s10, 0
    %12 = vsyncpa [#allocation6], 0
    %13 = vsyncpa [#allocation4], 0
    %s14 = scalar_lea.sflag [#allocation4], 1
    %15 = vsyncpa %s14, 0
    loop: start=0, step=1, limit=4
    $region2: #{tpu_custom_call.1} parent=1 // loop_pre_header
      _
    $region3: #{tpu_custom_call.1} parent=1 // loop_header
      %s17 = sphi 0, %s21
      %p18 = scmp.ge.s32.totalorder %s17, 4
      %s27 = sphi 0, %s29
      %s30 = sphi 0, %s27
      %s31 = sphi 0, %s30
      %s47 = sphi 0, %s31
      %s51 = sphi 0, %s51
      %s53 = sphi 0, %s51
      %s54 = sphi 0, %s53
      %s68 = sphi 0, %s54
      %s72 = sphi 0, %s72
      %s74 = sphi 0, %s72
      %s75 = sphi 0, %s74
      %s89 = sphi 0, %s75
      %s93 = sphi 0, %s93
      %s95 = sphi 0, %s93
      %s96 = sphi 0, %s95
      %s110 = sphi 0, %s96
      %s116 = sphi 0, %s118
      %s119 = sphi 0, %s116
      %s120 = sphi 0, %s119
      %s136 = sphi 0, %s120
    $region4: #{tpu_custom_call.1} parent=1 // loop_header_branch
      %20 = sbr.rel (%p18) target = $region8
    $region5: #{tpu_custom_call.1} parent=1 // loop_body
      %s22 = ssub.s32 %s17, 1
      %s23 = ssub.s32 %s17, 2
      %s24 = sadd.s32 %s17, 1
      %s25 = ssub.s32 %s17, %s24
      %p26 = scmp.eq.s32.totalorder %s25, 0
      %s28 = sadd.s32 %s27, 1
      %s29 = scalar_select %p26, %s27, %s28
      %p32 = pneg %p26
      %p33 = scmp.eq.s32.totalorder %s17, 1
      %p34 = por %p32, %p33
      %p35 = scmp.ne.s32.totalorder %s27, %s30
      %p36 = scmp.eq.s32.totalorder %s17, 0
      %p37 = por %p35, %p36
      %p38 = scmp.ne.s32.totalorder %s27, %s30
      %p39 = scmp.eq.s32.totalorder %s22, 1
      %p40 = por %p38, %p39
      %p41 = scmp.ne.s32.totalorder %s30, %s31
      %p42 = scmp.eq.s32.totalorder %s22, 0
      %p43 = por %p41, %p42
      %p44 = scmp.ne.s32.totalorder %s30, %s31
      %p45 = scmp.eq.s32.totalorder %s23, 1
      %p46 = por %p44, %p45
      %p48 = scmp.ne.s32.totalorder %s31, %s47
      %p49 = scmp.eq.s32.totalorder %s23, 0
      %p50 = por %p48, %p49
      %s52 = sadd.s32 %s51, 1
      %p55 = scmp.eq.s32.totalorder %s17, 1
      %p56 = scmp.ne.s32.totalorder %s51, %s53
      %p57 = scmp.eq.s32.totalorder %s17, 0
      %p58 = por %p56, %p57
      %p59 = scmp.ne.s32.totalorder %s51, %s53
      %p60 = scmp.eq.s32.totalorder %s22, 1
      %p61 = por %p59, %p60
      %p62 = scmp.ne.s32.totalorder %s53, %s54
      %p63 = scmp.eq.s32.totalorder %s22, 0
      %p64 = por %p62, %p63
      %p65 = scmp.ne.s32.totalorder %s53, %s54
      %p66 = scmp.eq.s32.totalorder %s23, 1
      %p67 = por %p65, %p66
      %p69 = scmp.ne.s32.totalorder %s54, %s68
      %p70 = scmp.eq.s32.totalorder %s23, 0
      %p71 = por %p69, %p70
      %s73 = sadd.s32 %s72, 1
      %p76 = scmp.eq.s32.totalorder %s17, 1
      %p77 = scmp.ne.s32.totalorder %s72, %s74
      %p78 = scmp.eq.s32.totalorder %s17, 0
      %p79 = por %p77, %p78
      %p80 = scmp.ne.s32.totalorder %s72, %s74
      %p81 = scmp.eq.s32.totalorder %s22, 1
      %p82 = por %p80, %p81
      %p83 = scmp.ne.s32.totalorder %s74, %s75
      %p84 = scmp.eq.s32.totalorder %s22, 0
      %p85 = por %p83, %p84
      %p86 = scmp.ne.s32.totalorder %s74, %s75
      %p87 = scmp.eq.s32.totalorder %s23, 1
      %p88 = por %p86, %p87
      %p90 = scmp.ne.s32.totalorder %s75, %s89
      %p91 = scmp.eq.s32.totalorder %s23, 0
      %p92 = por %p90, %p91
      %s94 = sadd.s32 %s93, 1
      %p97 = scmp.eq.s32.totalorder %s17, 1
      %p98 = scmp.ne.s32.totalorder %s93, %s95
      %p99 = scmp.eq.s32.totalorder %s17, 0
      %p100 = por %p98, %p99
      %p101 = scmp.ne.s32.totalorder %s93, %s95
      %p102 = scmp.eq.s32.totalorder %s22, 1
      %p103 = por %p101, %p102
      %p104 = scmp.ne.s32.totalorder %s95, %s96
      %p105 = scmp.eq.s32.totalorder %s22, 0
      %p106 = por %p104, %p105
      %p107 = scmp.ne.s32.totalorder %s95, %s96
      %p108 = scmp.eq.s32.totalorder %s23, 1
      %p109 = por %p107, %p108
      %p111 = scmp.ne.s32.totalorder %s96, %s110
      %p112 = scmp.eq.s32.totalorder %s23, 0
      %p113 = por %p111, %p112
      %s114 = ssub.s32 %s17, %s24
      %p115 = scmp.eq.s32.totalorder %s114, 0
      %s117 = sadd.s32 %s116, 1
      %s118 = scalar_select %p115, %s116, %s117
      %p121 = pneg %p115
      %p122 = scmp.eq.s32.totalorder %s17, 1
      %p123 = por %p121, %p122
      %p124 = scmp.ne.s32.totalorder %s116, %s119
      %p125 = scmp.eq.s32.totalorder %s17, 0
      %p126 = por %p124, %p125
      %p127 = scmp.ne.s32.totalorder %s116, %s119
      %p128 = scmp.eq.s32.totalorder %s22, 1
      %p129 = por %p127, %p128
      %p130 = scmp.ne.s32.totalorder %s119, %s120
      %p131 = scmp.eq.s32.totalorder %s22, 0
      %p132 = por %p130, %p131
      %p133 = scmp.ne.s32.totalorder %s119, %s120
      %p134 = scmp.eq.s32.totalorder %s23, 1
      %p135 = por %p133, %p134
      %p137 = scmp.ne.s32.totalorder %s120, %s136
      %p138 = scmp.eq.s32.totalorder %s23, 0
      %p139 = por %p137, %p138
      %p140 = scmp.le.s32.totalorder 1, %s17
      %p141 = scmp.lt.s32.totalorder %s17, 3
      %p142 = pnand %p140, %p141
      %p143 = pneg %p142
      // Predicated region
      $region9: #{tpu_custom_call.1} parent=5 // pred_check
        _
      $region10: #{tpu_custom_call.1} parent=5 // pred_check_branch
        %145 = sbr.rel (%p142) target = $region12
      $region11: #{tpu_custom_call.1} parent=5 // pred_region
        %s146 = ssub.s32 %s17, 1
        // Predicated region
        $region13: #{tpu_custom_call.1} parent=11 // pred_check
          %p147 = pneg %p64
        $region14: #{tpu_custom_call.1} parent=11 // pred_check_branch
          %149 = sbr.rel (%p147) target = $region16
        $region15: #{tpu_custom_call.1} parent=11 // pred_region
          _
        $region16: #{tpu_custom_call.1} parent=11 // pred_fallthru
          _
        // Predicated region
        $region17: #{tpu_custom_call.1} parent=11 // pred_check
          %p150 = pneg %p85
        $region18: #{tpu_custom_call.1} parent=11 // pred_check_branch
          %152 = sbr.rel (%p150) target = $region20
        $region19: #{tpu_custom_call.1} parent=11 // pred_region
          _
        $region20: #{tpu_custom_call.1} parent=11 // pred_fallthru
          _
        // Predicated region
        $region21: #{tpu_custom_call.1} parent=11 // pred_check
          %p153 = pneg %p106
        $region22: #{tpu_custom_call.1} parent=11 // pred_check_branch
          %155 = sbr.rel (%p153) target = $region24
        $region23: #{tpu_custom_call.1} parent=11 // pred_region
          %s157 = ssub.s32 512, 512
          %158 = vsyncadd [#allocation6], %s157
          %s159 = sshll.u32 [#allocation5], 4
          %s160 = int_to_ptr.vmem [resolvable:$true] %s159
          %165 = dma.hbm_to_vmem [thread:$0]  %s3, 512, %s160, [#allocation6], 128, 128, 8
        $region24: #{tpu_custom_call.1} parent=11 // pred_fallthru
          _
      $region12: #{tpu_custom_call.1} parent=5 // pred_fallthru
        _
      %p166 = scmp.lt.s32.totalorder %s17, 2
      // Predicated region
      $region25: #{tpu_custom_call.1} parent=5 // pred_check
        %p167 = pneg %p166
      $region26: #{tpu_custom_call.1} parent=5 // pred_check_branch
        %169 = sbr.rel (%p167) target = $region28
      $region27: #{tpu_custom_call.1} parent=5 // pred_region
        // Predicated region
        $region29: #{tpu_custom_call.1} parent=27 // pred_check
          %p170 = pneg %p37
        $region30: #{tpu_custom_call.1} parent=27 // pred_check_branch
          %172 = sbr.rel (%p170) target = $region32
        $region31: #{tpu_custom_call.1} parent=27 // pred_region
          %s173 = sand.u32 %s27, 1
          %s174 = scalar_lea.sflag [#allocation3], %s173
          %s175 = sand.u32 %s27, 1
          %s176 = smul.addr %s175, 64
          %s177 = scalar_lea.vmem [#allocation2], %s176
          %s179 = ssub.s32 1024, 1024
          %180 = vsyncadd %s174, %s179
          %s181 = smul.addr %s17, 8
          %s182 = smul.addr %s181, 128
          %s183 = scalar_lea.hbm %s0, %s182
          %s184 = sshll.u32 %s177, 4
          %s185 = int_to_ptr.vmem [resolvable:$true] %s184
          %190 = dma.hbm_to_vmem [thread:$0]  %s183, 1024, %s185, %s174, 256, 256, 16
        $region32: #{tpu_custom_call.1} parent=27 // pred_fallthru
          _
      $region28: #{tpu_custom_call.1} parent=5 // pred_fallthru
        _
      %p191 = scmp.le.s32.totalorder 1, %s17
      %p192 = scmp.lt.s32.totalorder %s17, 3
      %p193 = pnand %p191, %p192
      %p194 = pneg %p193
      // Predicated region
      $region33: #{tpu_custom_call.1} parent=5 // pred_check
        _
      $region34: #{tpu_custom_call.1} parent=5 // pred_check_branch
        %196 = sbr.rel (%p193) target = $region36
      $region35: #{tpu_custom_call.1} parent=5 // pred_region
        %s197 = ssub.s32 %s17, 1
        %s198 = sand.u32 %s30, 1
        %s199 = scalar_lea.sflag [#allocation3], %s198
        %s200 = sand.u32 %s30, 1
        %s201 = smul.addr %s200, 64
        %s202 = scalar_lea.vmem [#allocation2], %s201
        // Predicated region
        $region37: #{tpu_custom_call.1} parent=35 // pred_check
          %p203 = pneg %p43
        $region38: #{tpu_custom_call.1} parent=35 // pred_check_branch
          %205 = sbr.rel (%p203) target = $region40
        $region39: #{tpu_custom_call.1} parent=35 // pred_region
          %206 = dma.done %s199, 1024
        $region40: #{tpu_custom_call.1} parent=35 // pred_fallthru
          _
        // Predicated region
        $region41: #{tpu_custom_call.1} parent=35 // pred_check
          %p207 = pneg %p106
        $region42: #{tpu_custom_call.1} parent=35 // pred_check_branch
          %209 = sbr.rel (%p207) target = $region44
        $region43: #{tpu_custom_call.1} parent=35 // pred_region
          %210 = dma.done [#allocation6], 512
        $region44: #{tpu_custom_call.1} parent=35 // pred_fallthru
          _
        %s211 = sand.u32 %s30, 1
        %s212 = scalar_lea.sflag [#allocation3], %s211
        %s213 = sand.u32 %s30, 1
        %s214 = smul.addr %s213, 64
        %s215 = scalar_lea.vmem [#allocation2], %s214
        %p216 = pneg %p43
        %p217 = pneg %p40
        %p218 = pneg %p64
        %p219 = pneg %p61
        %p220 = pneg %p85
        %p221 = pneg %p82
        %p222 = pneg %p106
        %p223 = pneg %p103
        %p224 = pneg %p132
        %p225 = pneg %p129
        %s226 = sand.u32 %s119, 1
        %s227 = scalar_lea.sflag [#allocation4], %s226
        %s228 = sand.u32 %s119, 1
        %s229 = smul.addr %s228, 64
        %s230 = scalar_lea.vmem [#allocation7], %s229
        %v231 = vld [vmem:[%s202] sm:$0xff]
        %v232 = vld [vmem:[%s202 + $0x8] sm:$0xff]
        %v233 = vld [vmem:[%s202 + $0x10] sm:$0xff]
        %v234 = vld [vmem:[%s202 + $0x18] sm:$0xff]
        %v235 = vld [vmem:[%s202 + $0x20] sm:$0xff]
        %v236 = vld [vmem:[%s202 + $0x28] sm:$0xff]
        %v237 = vld [vmem:[%s202 + $0x30] sm:$0xff]
        %v238 = vld [vmem:[%s202 + $0x38] sm:$0xff]
        %v239 = vld [vmem:[%s1] sm:$0xff]
        %v240 = vld [vmem:[%s1 + $0x8] sm:$0xff]
        %v241 = vld [vmem:[%s1 + $0x10] sm:$0xff]
        %v242 = vld [vmem:[%s1 + $0x18] sm:$0xff]
        %244 = vset.pattern.permute.xlu0 0
        %245 = vperm.xlu0 %244, %v239
        %v246 = vpop.permute.xlu0 %245
        %249 = vset.pattern.permute.xlu0 0
        %250 = vperm.xlu0 %249, %v240
        %v251 = vpop.permute.xlu0 %250
        %254 = vset.pattern.permute.xlu0 0
        %255 = vperm.xlu0 %254, %v241
        %v256 = vpop.permute.xlu0 %255
        %259 = vset.pattern.permute.xlu0 0
        %260 = vperm.xlu0 %259, %v242
        %v261 = vpop.permute.xlu0 %260
        %v263 = vmul.f32 %v231, %v246
        %v264 = vmul.f32 %v232, %v246
        %v265 = vmul.f32 %v233, %v251
        %v266 = vmul.f32 %v234, %v251
        %v267 = vmul.f32 %v235, %v256
        %v268 = vmul.f32 %v236, %v256
        %v269 = vmul.f32 %v237, %v261
        %v270 = vmul.f32 %v238, %v261
        %v271 = vadd.f32 %v263, %v265
        %v272 = vadd.f32 %v271, %v267
        %v273 = vadd.f32 %v272, %v269
        %v274 = vrot.slane %v273, 4
        %v275 = vadd.f32 %v273, %v274
        %v276 = vrot.slane %v275, 2
        %v277 = vadd.f32 %v275, %v276
        %v278 = vrot.slane %v277, 1
        %v279 = vadd.f32 %v277, %v278
        %v280 = vadd.f32 %v264, %v266
        %v281 = vadd.f32 %v280, %v268
        %v282 = vadd.f32 %v281, %v270
        %v283 = vrot.slane %v282, 4
        %v284 = vadd.f32 %v282, %v283
        %v285 = vrot.slane %v284, 2
        %v286 = vadd.f32 %v284, %v285
        %v287 = vrot.slane %v286, 1
        %v288 = vadd.f32 %v286, %v287
        %v289 = vmax.f32 %v279, %v288
        %290 = vmax.xlane.f32.xlu0 %v289
        %v291 = vpop.xlane.xlu0 %290
        %v292 = vsub.f32 %v279, %v291
        %v293 = vsub.f32 %v288, %v291
        %v294 = vmul.f32 %v292, 1.442695
        %v295 = vpow.pop %v294
        %v296 = vmul.f32 %v293, 1.442695
        %v297 = vpow.pop %v296
        %v298 = vadd.f32 %v295, %v297
        %299 = vadd.xlane.f32.xlu0 %v298
        %v300 = vpop.xlane.xlu0 %299
        %v301 = vrcp.pop %v300
        %v302 = vmul.f32 %v295, %v301
        %v303 = vmul.f32 %v297, %v301
        %v304 = vmul.f32 %v231, %v302
        %v305 = vmul.f32 %v232, %v303
        %v306 = vmul.f32 %v233, %v302
        %v307 = vmul.f32 %v234, %v303
        %v308 = vmul.f32 %v235, %v302
        %v309 = vmul.f32 %v236, %v303
        %v310 = vmul.f32 %v237, %v302
        %v311 = vmul.f32 %v238, %v303
        %v312 = vadd.f32 %v304, %v305
        %313 = vadd.xlane.f32.xlu0 %v312
        %v314 = vpop.xlane.xlu0 %313
        %v315 = vadd.f32 %v306, %v307
        %316 = vadd.xlane.f32.xlu0 %v315
        %v317 = vpop.xlane.xlu0 %316
        %v318 = vadd.f32 %v308, %v309
        %319 = vadd.xlane.f32.xlu0 %v318
        %v320 = vpop.xlane.xlu0 %319
        %v321 = vadd.f32 %v310, %v311
        %322 = vadd.xlane.f32.xlu0 %v321
        %v323 = vpop.xlane.xlu0 %322
        %v324 = vld [vmem:[%s2] sm:$0xff]
        %v325 = vld [vmem:[%s2 + $0x8] sm:$0xff]
        %v326 = vld [vmem:[%s2 + $0x10] sm:$0xff]
        %v327 = vld [vmem:[%s2 + $0x18] sm:$0xff]
        %v328 = vmul.f32 %v324, %v314
        %v329 = vmul.f32 %v325, %v317
        %v330 = vmul.f32 %v326, %v320
        %v331 = vmul.f32 %v327, %v323
        %vm332 = vcmask 261120
        %v333 = vsel %vm332, %v328, 0.0
        %v334 = vsel %vm332, %v329, 0.0
        %v335 = vadd.f32 %v333, %v334
        %v336 = vsel %vm332, %v330, 0.0
        %v337 = vadd.f32 %v335, %v336
        %v338 = vsel %vm332, %v331, 0.0
        %v339 = vadd.f32 %v337, %v338
        %v340 = vrot.slane %v339, 4
        %v341 = vadd.f32 %v339, %v340
        %v342 = vrot.slane %v341, 2
        %v343 = vadd.f32 %v341, %v342
        %v344 = vrot.slane %v343, 1
        %v345 = vadd.f32 %v343, %v344
        %vm346 = vcmp.ge.f32.partialorder %v345, 0.0
        %v347 = vmul.f32 %v345, 0.2
        %v348 = vsel %vm346, %v345, %v347
        %v349 = vld [vmem:[#allocation5] sm:$0xff]
        %v350 = vld [vmem:[#allocation5 + $0x8] sm:$0xff]
        %v351 = vld [vmem:[#allocation5 + $0x10] sm:$0xff]
        %v352 = vld [vmem:[#allocation5 + $0x18] sm:$0xff]
        %v353 = vmul.f32 %v349, %v348
        %v354 = vmul.f32 %v350, %v348
        %v355 = vmul.f32 %v351, %v348
        %v356 = vmul.f32 %v352, %v348
        %v357 = vsel %vm332, %v353, 0.0
        %358 = vadd.xlane.f32.xlu0 %v357
        %v359 = vpop.xlane.xlu0 %358
        %v360 = vsel %vm332, %v354, 0.0
        %361 = vadd.xlane.f32.xlu0 %v360
        %v362 = vpop.xlane.xlu0 %361
        %v363 = vsel %vm332, %v355, 0.0
        %364 = vadd.xlane.f32.xlu0 %v363
        %v365 = vpop.xlane.xlu0 %364
        %v366 = vsel %vm332, %v356, 0.0
        %367 = vadd.xlane.f32.xlu0 %v366
        %v368 = vpop.xlane.xlu0 %367
        %v369 = vadd.f32 %v231, %v359
        %v370 = vadd.f32 %v232, %v359
        %v371 = vadd.f32 %v233, %v362
        %v372 = vadd.f32 %v234, %v362
        %v373 = vadd.f32 %v235, %v365
        %v374 = vadd.f32 %v236, %v365
        %v375 = vadd.f32 %v237, %v368
        %v376 = vadd.f32 %v238, %v368
        %377 = vst [vmem:[%s230] sm:$0xff] %v369
        %378 = vst [vmem:[%s230 + $0x8] sm:$0xff] %v370
        %379 = vst [vmem:[%s230 + $0x10] sm:$0xff] %v371
        %380 = vst [vmem:[%s230 + $0x18] sm:$0xff] %v372
        %381 = vst [vmem:[%s230 + $0x20] sm:$0xff] %v373
        %382 = vst [vmem:[%s230 + $0x28] sm:$0xff] %v374
        %383 = vst [vmem:[%s230 + $0x30] sm:$0xff] %v375
        %384 = vst [vmem:[%s230 + $0x38] sm:$0xff] %v376
        %s385 = sand.u32 %s119, 1
        %s386 = scalar_lea.sflag [#allocation4], %s385
        %s387 = sand.u32 %s119, 1
        %s388 = smul.addr %s387, 64
        %s389 = scalar_lea.vmem [#allocation7], %s388
        // Predicated region
        $region45: #{tpu_custom_call.1} parent=35 // pred_check
          %p390 = pneg %p129
        $region46: #{tpu_custom_call.1} parent=35 // pred_check_branch
          %392 = sbr.rel (%p390) target = $region48
        $region47: #{tpu_custom_call.1} parent=35 // pred_region
          %s394 = ssub.s32 1024, 1024
          %395 = vsyncadd %s386, %s394
          %s396 = smul.addr %s22, 8
          %s397 = smul.addr %s396, 128
          %s398 = scalar_lea.hbm %s4, %s397
          %s399 = sshll.u32 %s389, 4
          %s400 = int_to_ptr.vmem [resolvable:$true] %s399
          %405 = dma.vmem_to_hbm [thread:$0]  %s400, 1024, %s398, %s386, 256, 256, 16
        $region48: #{tpu_custom_call.1} parent=35 // pred_fallthru
          _
      $region36: #{tpu_custom_call.1} parent=5 // pred_fallthru
        _
      %p406 = scmp.le.s32.totalorder 2, %s17
      // Predicated region
      $region49: #{tpu_custom_call.1} parent=5 // pred_check
        %p407 = pneg %p406
      $region50: #{tpu_custom_call.1} parent=5 // pred_check_branch
        %409 = sbr.rel (%p407) target = $region52
      $region51: #{tpu_custom_call.1} parent=5 // pred_region
        %s410 = ssub.s32 %s17, 2
        // Predicated region
        $region53: #{tpu_custom_call.1} parent=51 // pred_check
          %p411 = pneg %p135
        $region54: #{tpu_custom_call.1} parent=51 // pred_check_branch
          %413 = sbr.rel (%p411) target = $region56
        $region55: #{tpu_custom_call.1} parent=51 // pred_region
          %s414 = sand.u32 %s120, 1
          %s415 = scalar_lea.sflag [#allocation4], %s414
          %s416 = sand.u32 %s120, 1
          %s417 = smul.addr %s416, 64
          %s418 = scalar_lea.vmem [#allocation7], %s417
          %419 = dma.done %s415, 1024
        $region56: #{tpu_custom_call.1} parent=51 // pred_fallthru
          _
      $region52: #{tpu_custom_call.1} parent=5 // pred_fallthru
        _
    $region6: #{tpu_custom_call.1} parent=1 // loop_footer
      %s21 = sadd.s32 1, %s17
    $region7: #{tpu_custom_call.1} parent=1 // loop_footer_branch
      %16 = sbr.rel target = $region3
    $region8: #{tpu_custom_call.1} parent=1 // loop_exit
      _
    %420 = vsyncpa [#allocation3], 1
    %s421 = scalar_lea.sflag [#allocation3], 1
    %422 = vsyncpa %s421, 1
    %423 = vsyncpa [#allocation6], 1
    %424 = vsyncpa [#allocation4], 1
    %s425 = scalar_lea.sflag [#allocation4], 1
    %426 = vsyncpa %s425, 1

</llo_original>
